<compile_context>
chip_gen: v5e
topology: v5e:2x2
jax: 0.10.0
libtpu: 0.0.40
codegen_flags: <defaults>
</compile_context>

<pallas_src>
import functools

import jax
import jax.numpy as jnp
from jax.experimental import pallas as pl
from jax.experimental.pallas import tpu as pltpu

NEG_INF = -1e30   # large finite negative: exp() underflows to 0.0, never produces NaN


# ----------------------------------------------------------------------------
# Kernel 1: Q/K/V projection (runs once per token tile, not once per (qi, ki)).
# ----------------------------------------------------------------------------
def qkv_proj_kernel(x_ref, wq_ref, bq_ref, wk_ref, bk_ref, wv_ref, bv_ref,
                    q_ref, k_ref, v_ref, *, scale, compute_dtype):
    x = x_ref[0].astype(compute_dtype)                                  # (ts, D)

    def proj(w_ref, b_ref):
        return jnp.dot(x, w_ref[...].astype(compute_dtype),
                       preferred_element_type=jnp.float32) + b_ref[...]

    # Three separate dots keep every output lane-aligned; for d_internal % 128 == 0 one
    # could fuse Wq|Wk|Wv into a single (D, 3*DI) dot with aligned slices instead.
    q_ref[0] = (proj(wq_ref, bq_ref) * scale).astype(q_ref.dtype)       # scale folded in
    k_ref[0] = proj(wk_ref, bk_ref).astype(k_ref.dtype)
    v_ref[0] = proj(wv_ref, bv_ref).astype(v_ref.dtype)


# ----------------------------------------------------------------------------
# Kernel 2: causal flash attention over a triangular (qi, ki) pair grid + W0.
# ----------------------------------------------------------------------------
def attn_kernel(qi_tab, ki_tab, q_ref, k_ref, v_ref, w0_ref, b0_ref, o_ref,
                m_s, l_s, acc_s, *, tq, tk, compute_dtype, approx_recip):
    p = pl.program_id(1)
    qi = qi_tab[p]
    ki = ki_tab[p]

    # CORRECTNESS: the online-softmax state below lives in VMEM scratch.  This requires
    # the flattened (qi, ki) pair axis to remain the innermost, sequential ("arbitrary")
    # grid axis so the ki == 0 reset and ki == last finalize run in order per q tile.
    @pl.when(ki == 0)
    def _():
        m_s[...] = jnp.full_like(m_s, NEG_INF)
        l_s[...] = jnp.zeros_like(l_s)
        acc_s[...] = jnp.zeros_like(acc_s)

    q = q_ref[0]                      # (tq, DI) compute_dtype, pre-scaled by 1/sqrt(d_k)
    k = k_ref[0]                      # (tk, DI)
    v = v_ref[0]                      # (tk, DI)

    def softmax_update(apply_mask):
        # scores: contract the last dims directly (no K^T materialized / XLU transpose)
        s = jax.lax.dot_general(q, k, dimension_numbers=(((1,), (1,)), ((), ())),
                                preferred_element_type=jnp.float32)     # (tq, tk) f32
        if apply_mask:
            row = qi * tq + jax.lax.broadcasted_iota(jnp.int32, (tq, tk), 0)
            col = ki * tk + jax.lax.broadcasted_iota(jnp.int32, (tq, tk), 1)
            s = jnp.where(col <= row, s, NEG_INF)
        m_prev = m_s[...]
        m_new = jnp.maximum(m_prev, jnp.max(s, axis=-1, keepdims=True))  # (tq, 1)
        alpha = jnp.exp(m_prev - m_new)
        pexp = jnp.exp(s - m_new)                                        # (tq, tk) f32
        l_s[...] = alpha * l_s[...] + jnp.sum(pexp, axis=-1, keepdims=True)
        acc_s[...] = alpha * acc_s[...] + jnp.dot(
            pexp.astype(compute_dtype), v, preferred_element_type=jnp.float32)
        m_s[...] = m_new

    # Only tiles straddling the causal diagonal pay for the iota/compare/select mask;
    # tiles entirely below the diagonal take the unmasked branch.  (Every row sees at
    # least one unmasked column at ki == 0, so m/l never stay at NEG_INF/0.)
    straddles = ki * tk + (tk - 1) > qi * tq

    @pl.when(straddles)
    def _():
        softmax_update(apply_mask=True)

    @pl.when(jnp.logical_not(straddles))
    def _():
        softmax_update(apply_mask=False)

    # Finalize after the last kv tile of this q tile: normalize the small (tq, DI)
    # accumulator once, then apply the (lane-padded) output projection.
    last_ki = (qi * tq + tq - 1) // tk

    @pl.when(ki == last_ki)
    def _():
        logit = acc_s[...] * pl.reciprocal(l_s[...], approx=approx_recip)  # (tq, DI)
        out = jnp.dot(logit.astype(compute_dtype),
                      w0_ref[...].astype(compute_dtype),
                      preferred_element_type=jnp.float32) + b0_ref[...]    # (tq, DO_pad)
        o_ref[0] = out.astype(o_ref.dtype)


# ----------------------------------------------------------------------------
# Wrappers
# ----------------------------------------------------------------------------
def _round_up(x, m):
    return (x + m - 1) // m * m


def _compiler_params(semantics, vmem_bytes_estimate):
    # Raise the scoped-VMEM limit above the per-chip defaults (16 MiB v5e, 32 MiB v6e/v7x)
    # when the tiling needs it; cap at 48 MiB so it still fits v7x's 64 MiB physical VMEM.
    limit = int(min(max(vmem_bytes_estimate * 5 // 4, 32 * 1024 * 1024),
                    48 * 1024 * 1024))
    return pltpu.CompilerParams(dimension_semantics=semantics, vmem_limit_bytes=limit)


def qkv_project(x, wq, bq, wk, bk, wv, bv, *, scale, ts, compute_dtype):
    B, S, D = x.shape
    DI = wq.shape[1]
    const = lambda b, si: (0, 0)
    out_spec = pl.BlockSpec((1, ts, DI), lambda b, si: (b, si, 0))
    grid_spec = pltpu.PrefetchScalarGridSpec(
        num_scalar_prefetch=0,
        grid=(B, S // ts),
        in_specs=[
            pl.BlockSpec((1, ts, D), lambda b, si: (b, si, 0)),   # x tile (read once)
            pl.BlockSpec((D, DI), const), pl.BlockSpec((1, DI), const),   # Wq, bq
            pl.BlockSpec((D, DI), const), pl.BlockSpec((1, DI), const),   # Wk, bk
            pl.BlockSpec((D, DI), const), pl.BlockSpec((1, DI), const),   # Wv, bv
        ],
        out_specs=(out_spec, out_spec, out_spec),
    )
    itemsize = jnp.dtype(compute_dtype).itemsize
    est = (2 * ts * D * 4                     # double-buffered x tile
           + 2 * 3 * (D + 1) * DI * 4         # weights + biases (pipeline buffers)
           + 2 * 3 * ts * DI * itemsize)      # q/k/v output tiles
    kernel = functools.partial(qkv_proj_kernel, scale=scale, compute_dtype=compute_dtype)
    qkv_shape = jax.ShapeDtypeStruct((B, S, DI), compute_dtype)
    return pl.pallas_call(
        kernel,
        out_shape=(qkv_shape, qkv_shape, qkv_shape),
        grid_spec=grid_spec,
        compiler_params=_compiler_params(("parallel", "parallel"), est),
    )(x, wq, bq, wk, bk, wv, bv)


def causal_attention(q, k, v, w0p, b0p, *, tq, tk, compute_dtype, out_dtype):
    B, S, DI = q.shape
    DO_pad = w0p.shape[1]
    nq = S // tq

    # Lower-triangular (qi, ki) tile pairs only: above-diagonal tiles are never visited,
    # so they cost neither DMA nor the ~0.35 us per-grid-step overhead.
    qi_list, ki_list = [], []
    for qi in range(nq):
        last_ki = (qi * tq + tq - 1) // tk
        qi_list += [qi] * (last_ki + 1)
        ki_list += list(range(last_ki + 1))
    qi_tab = jnp.asarray(qi_list, jnp.int32)
    ki_tab = jnp.asarray(ki_list, jnp.int32)
    n_pairs = len(qi_list)

    approx_recip = jnp.dtype(compute_dtype) != jnp.dtype(jnp.float32)
    kernel = functools.partial(attn_kernel, tq=tq, tk=tk,
                               compute_dtype=compute_dtype, approx_recip=approx_recip)
    const = lambda b, p, qt, kt: (0, 0)
    grid_spec = pltpu.PrefetchScalarGridSpec(
        num_scalar_prefetch=2,
        grid=(B, n_pairs),
        in_specs=[
            pl.BlockSpec((1, tq, DI), lambda b, p, qt, kt: (b, qt[p], 0)),  # q tile
            pl.BlockSpec((1, tk, DI), lambda b, p, qt, kt: (b, kt[p], 0)),  # k tile
            pl.BlockSpec((1, tk, DI), lambda b, p, qt, kt: (b, kt[p], 0)),  # v tile
            pl.BlockSpec((DI, DO_pad), const),                              # W0 (padded)
            pl.BlockSpec((1, DO_pad), const),                               # b0 (padded)
        ],
        out_specs=pl.BlockSpec((1, tq, DO_pad), lambda b, p, qt, kt: (b, qt[p], 0)),
        scratch_shapes=[
            pltpu.VMEM((tq, 1), jnp.float32),    # running max m
            pltpu.VMEM((tq, 1), jnp.float32),    # running denom l
            pltpu.VMEM((tq, DI), jnp.float32),   # unnormalized output accumulator
        ],
    )
    itemsize = jnp.dtype(compute_dtype).itemsize
    est = (2 * (tq + 2 * tk) * DI * itemsize   # q/k/v tiles (double-buffered)
           + 2 * (DI + 1) * DO_pad * 4         # W0/b0 pipeline buffers
           + 2 * tq * DO_pad * 4               # output tile
           + tq * (DI + 2) * 4)                # scratch
    # NOTE: the pair axis must stay innermost + "arbitrary" for the online-softmax scratch.
    # On v7x (2 TensorCores) core balance comes from the "parallel" batch axis (B >= 2);
    # for B == 1 prefer a (B, nq, nk) grid with a clamped kv index_map so qi is parallel.
    return pl.pallas_call(
        kernel,
        out_shape=jax.ShapeDtypeStruct((B, S, DO_pad), out_dtype),
        grid_spec=grid_spec,
        compiler_params=_compiler_params(("parallel", "arbitrary"), est),
    )(qi_tab, ki_tab, q, k, v, w0p, b0p)


def head_forward(x, params, *, tq=None, tk=None, compute_dtype=jnp.bfloat16):
    """x: (B, S, d_model) f32 -> (B, S, d_model // num_heads).

    bf16 MXU operands by default (f32 accumulation + f32 softmax stats); pass
    compute_dtype=jnp.float32 for an exact-operand check against the reference.
    """
    B, S, D = x.shape
    wq, bq, wk, bk, wv, bv, w0, b0 = params
    DI = wq.shape[1]
    DO = w0.shape[1]

    # Large tiles amortize the ~0.35 us per-grid-step overhead (512-wide tiles measured
    # ~85% of HBM roofline vs 63% at 256); shrink automatically for short sequences.
    if tq is None:
        tq = S if S <= 512 else 512
    if tk is None:
        tk = S if S <= 512 else 512
    assert S % tq == 0 and S % tk == 0, "seq_length must be divisible by the tile sizes"
    # TODO(synk): ragged / non-divisible sequence lengths would need a partial-tile mask.

    # 1) Project Q (pre-scaled), K, V exactly once per token.
    q, k, v = qkv_project(x, wq, bq, wk, bk, wv, bv,
                          scale=DI ** -0.5, ts=tq, compute_dtype=compute_dtype)

    # 2) Lane-dense output: pad the per-head output dim up to a multiple of 128 so the
    #    attention kernel issues unmasked vector stores; slice the padding off outside.
    #    (A fully lane-dense multi-head fusion is outside this single-head module's spec.)
    DO_pad = _round_up(DO, 128)
    if DO_pad != DO:
        w0p = jnp.pad(w0, ((0, 0), (0, DO_pad - DO)))
        b0p = jnp.pad(b0, ((0, 0), (0, DO_pad - DO)))
    else:
        w0p, b0p = w0, b0

    out = causal_attention(q, k, v, w0p, b0p, tq=tq, tk=tk,
                           compute_dtype=compute_dtype, out_dtype=x.dtype)
    return out[..., :DO] if DO_pad != DO else out


# ----------------------------------------------------------------------------
# Synthetic parameters + plain-JAX reference
# ----------------------------------------------------------------------------
def make_params(key, d_model, d_internal, num_heads):
    """Deterministic synthetic parameters (nn.Linear-style uniform init).
    Returns (wq, bq, wk, bk, wv, bv, w0, b0), weights as (in_features, out_features)."""
    d_out = d_model // num_heads
    keys = jax.random.split(key, 8)

    def lin(kw, kb, fan_in, fan_out):
        bound = 1.0 / (fan_in ** 0.5)
        w = jax.random.uniform(kw, (fan_in, fan_out), jnp.float32, -bound, bound)
        b = jax.random.uniform(kb, (1, fan_out), jnp.float32, -bound, bound)
        return w, b

    wq, bq = lin(keys[0], keys[1], d_model, d_internal)
    wk, bk = lin(keys[2], keys[3], d_model, d_internal)
    wv, bv = lin(keys[4], keys[5], d_model, d_internal)
    w0, b0 = lin(keys[6], keys[7], d_internal, d_out)
    return (wq, bq, wk, bk, wv, bv, w0, b0)


def head_reference(x, params):
    """Plain-JAX reference mirroring the PyTorch forward (explicit tril mask, -inf fill)."""
    wq, bq, wk, bk, wv, bv, w0, b0 = params
    S = x.shape[1]
    tril = jnp.tril(jnp.ones((S, S), jnp.float32))
    q = x @ wq + bq
    k = x @ wk + bk
    v = x @ wv + bv
    d_k = k.shape[-1]
    w = jnp.einsum('bqd,bkd->bqk', q, k) * (d_k ** -0.5)
    w = jnp.where(tril == 0.0, -jnp.inf, w)
    a = jax.nn.softmax(w, axis=-1)
    return jnp.einsum('bqk,bkd->bqd', a, v) @ w0 + b0


if __name__ == "__main__":
    # small shapes consistent with the module
    B, seq_length, d_model, num_heads, d_internal = 2, 8, 32, 4, 16

    key = jax.random.PRNGKey(0)
    k_x, k_p = jax.random.split(key)

    x = jax.random.normal(k_x, (B, seq_length, d_model), jnp.float32)
    params = make_params(k_p, d_model, d_internal, num_heads)

    ref = head_reference(x, params)

    # exact-operand path: f32 MXU operands + exact reciprocal, tight check vs reference
    out_f32 = jax.block_until_ready(head_forward(x, params, compute_dtype=jnp.float32))
    assert out_f32.shape == (B, seq_length, d_model // num_heads)
    assert jnp.allclose(out_f32, ref, atol=3e-5, rtol=3e-5)

    # default path: bf16 MXU operands, f32 accumulation / softmax stats
    out_bf16 = jax.block_until_ready(head_forward(x, params))
    assert out_bf16.shape == (B, seq_length, d_model // num_heads)
    assert jnp.allclose(out_bf16, ref, atol=5e-2, rtol=5e-2)

    print("KERNEL_OK")
</pallas_src>

<mosaic_0001>
module attributes {stable_mosaic.version = 11 : i64} {
  func.func @qkv_proj_kernel(%arg0: i32, %arg1: i32, %arg2: memref<1x8x32xf32, #tpu.memory_space<vmem>>, %arg3: memref<32x16xf32, #tpu.memory_space<vmem>>, %arg4: memref<1x16xf32, #tpu.memory_space<vmem>>, %arg5: memref<32x16xf32, #tpu.memory_space<vmem>>, %arg6: memref<1x16xf32, #tpu.memory_space<vmem>>, %arg7: memref<32x16xf32, #tpu.memory_space<vmem>>, %arg8: memref<1x16xf32, #tpu.memory_space<vmem>>, %arg9: memref<1x8x16xf32, #tpu.memory_space<vmem>>, %arg10: memref<1x8x16xf32, #tpu.memory_space<vmem>>, %arg11: memref<1x8x16xf32, #tpu.memory_space<vmem>>) attributes {dimension_semantics = [#tpu.dimension_semantics<parallel>, #tpu.dimension_semantics<parallel>], iteration_bounds = array<i64: 2, 1>, scalar_prefetch = 0 : i64, scratch_operands = 0 : i64, tpu.core_type = #tpu.core_type<tc>, window_params = [{transform_indices = @transform_0, window_bounds = array<i64: 1, 8, 32>}, {pipeline_mode = #tpu.pipeline_mode<synchronous>, transform_indices = @transform_1, window_bounds = array<i64: 32, 16>}, {pipeline_mode = #tpu.pipeline_mode<synchronous>, transform_indices = @transform_2, window_bounds = array<i64: 1, 16>}, {pipeline_mode = #tpu.pipeline_mode<synchronous>, transform_indices = @transform_3, window_bounds = array<i64: 32, 16>}, {pipeline_mode = #tpu.pipeline_mode<synchronous>, transform_indices = @transform_4, window_bounds = array<i64: 1, 16>}, {pipeline_mode = #tpu.pipeline_mode<synchronous>, transform_indices = @transform_5, window_bounds = array<i64: 32, 16>}, {pipeline_mode = #tpu.pipeline_mode<synchronous>, transform_indices = @transform_6, window_bounds = array<i64: 1, 16>}, {transform_indices = @transform_7, window_bounds = array<i64: 1, 8, 16>}, {transform_indices = @transform_8, window_bounds = array<i64: 1, 8, 16>}, {transform_indices = @transform_9, window_bounds = array<i64: 1, 8, 16>}]} {
    %c0 = arith.constant 0 : index
    %c0_0 = arith.constant 0 : index
    %c0_1 = arith.constant 0 : index
    %0 = vector.load %arg2[%c0, %c0_0, %c0_1] : memref<1x8x32xf32, #tpu.memory_space<vmem>>, vector<1x8x32xf32>
    %1 = vector.shape_cast %0 : vector<1x8x32xf32> to vector<8x32xf32>
    %c0_2 = arith.constant 0 : index
    %c0_3 = arith.constant 0 : index
    %2 = vector.load %arg3[%c0_2, %c0_3] : memref<32x16xf32, #tpu.memory_space<vmem>>, vector<32x16xf32>
    %cst = arith.constant dense<0.000000e+00> : vector<8x16xf32>
    %3 = tpu.matmul %1, %2, %cst {dimension_numbers = #tpu.dot_dimension_numbers<[1], [0], [0], [1], [0, 0, 1, 1], [], []>} : vector<8x32xf32>, vector<32x16xf32>, vector<8x16xf32> -> vector<8x16xf32>
    %c0_4 = arith.constant 0 : index
    %c0_5 = arith.constant 0 : index
    %4 = vector.load %arg4[%c0_4, %c0_5] : memref<1x16xf32, #tpu.memory_space<vmem>>, vector<1x16xf32>
    %5 = vector.broadcast %4 : vector<1x16xf32> to vector<8x16xf32>
    %6 = arith.addf %3, %5 : vector<8x16xf32>
    %cst_6 = arith.constant 2.500000e-01 : f32
    %7 = vector.broadcast %cst_6 : f32 to vector<8x16xf32>
    %8 = arith.mulf %6, %7 : vector<8x16xf32>
    %c0_7 = arith.constant 0 : index
    %c0_8 = arith.constant 0 : index
    %c0_9 = arith.constant 0 : index
    %9 = vector.load %arg9[%c0_7, %c0_8, %c0_9] : memref<1x8x16xf32, #tpu.memory_space<vmem>>, vector<1x8x16xf32>
    %10 = vector.shape_cast %9 : vector<1x8x16xf32> to vector<8x16xf32>
    %11 = vector.shape_cast %8 : vector<8x16xf32> to vector<1x8x16xf32>
    tpu.vector_store %arg9[%c0_7, %c0_8, %c0_9], %11 {strides = array<i32>} : memref<1x8x16xf32, #tpu.memory_space<vmem>>, vector<1x8x16xf32>,
    %c0_10 = arith.constant 0 : index
    %c0_11 = arith.constant 0 : index
    %12 = vector.load %arg5[%c0_10, %c0_11] : memref<32x16xf32, #tpu.memory_space<vmem>>, vector<32x16xf32>
    %cst_12 = arith.constant dense<0.000000e+00> : vector<8x16xf32>
    %13 = tpu.matmul %1, %12, %cst_12 {dimension_numbers = #tpu.dot_dimension_numbers<[1], [0], [0], [1], [0, 0, 1, 1], [], []>} : vector<8x32xf32>, vector<32x16xf32>, vector<8x16xf32> -> vector<8x16xf32>
    %c0_13 = arith.constant 0 : index
    %c0_14 = arith.constant 0 : index
    %14 = vector.load %arg6[%c0_13, %c0_14] : memref<1x16xf32, #tpu.memory_space<vmem>>, vector<1x16xf32>
    %15 = vector.broadcast %14 : vector<1x16xf32> to vector<8x16xf32>
    %16 = arith.addf %13, %15 : vector<8x16xf32>
    %c0_15 = arith.constant 0 : index
    %c0_16 = arith.constant 0 : index
    %c0_17 = arith.constant 0 : index
    %17 = vector.load %arg10[%c0_15, %c0_16, %c0_17] : memref<1x8x16xf32, #tpu.memory_space<vmem>>, vector<1x8x16xf32>
    %18 = vector.shape_cast %17 : vector<1x8x16xf32> to vector<8x16xf32>
    %19 = vector.shape_cast %16 : vector<8x16xf32> to vector<1x8x16xf32>
    tpu.vector_store %arg10[%c0_15, %c0_16, %c0_17], %19 {strides = array<i32>} : memref<1x8x16xf32, #tpu.memory_space<vmem>>, vector<1x8x16xf32>,
    %c0_18 = arith.constant 0 : index
    %c0_19 = arith.constant 0 : index
    %20 = vector.load %arg7[%c0_18, %c0_19] : memref<32x16xf32, #tpu.memory_space<vmem>>, vector<32x16xf32>
    %cst_20 = arith.constant dense<0.000000e+00> : vector<8x16xf32>
    %21 = tpu.matmul %1, %20, %cst_20 {dimension_numbers = #tpu.dot_dimension_numbers<[1], [0], [0], [1], [0, 0, 1, 1], [], []>} : vector<8x32xf32>, vector<32x16xf32>, vector<8x16xf32> -> vector<8x16xf32>
    %c0_21 = arith.constant 0 : index
    %c0_22 = arith.constant 0 : index
    %22 = vector.load %arg8[%c0_21, %c0_22] : memref<1x16xf32, #tpu.memory_space<vmem>>, vector<1x16xf32>
    %23 = vector.broadcast %22 : vector<1x16xf32> to vector<8x16xf32>
    %24 = arith.addf %21, %23 : vector<8x16xf32>
    %c0_23 = arith.constant 0 : index
    %c0_24 = arith.constant 0 : index
    %c0_25 = arith.constant 0 : index
    %25 = vector.load %arg11[%c0_23, %c0_24, %c0_25] : memref<1x8x16xf32, #tpu.memory_space<vmem>>, vector<1x8x16xf32>
    %26 = vector.shape_cast %25 : vector<1x8x16xf32> to vector<8x16xf32>
    %27 = vector.shape_cast %24 : vector<8x16xf32> to vector<1x8x16xf32>
    tpu.vector_store %arg11[%c0_23, %c0_24, %c0_25], %27 {strides = array<i32>} : memref<1x8x16xf32, #tpu.memory_space<vmem>>, vector<1x8x16xf32>,
    return
  }
  func.func @transform_0(%arg0: i32, %arg1: i32) -> (i32, i32, i32) {
    %c0_i32 = arith.constant 0 : i32
    %c0_i32_0 = arith.constant 0 : i32
    return %arg0, %arg1, %c0_i32 : i32, i32, i32
  }
  func.func @transform_1(%arg0: i32, %arg1: i32) -> (i32, i32) {
    %c0_i32 = arith.constant 0 : i32
    %c0_i32_0 = arith.constant 0 : i32
    %c0_i32_1 = arith.constant 0 : i32
    return %c0_i32, %c0_i32_0 : i32, i32
  }
  func.func @transform_2(%arg0: i32, %arg1: i32) -> (i32, i32) {
    %c0_i32 = arith.constant 0 : i32
    %c0_i32_0 = arith.constant 0 : i32
    %c0_i32_1 = arith.constant 0 : i32
    return %c0_i32, %c0_i32_0 : i32, i32
  }
  func.func @transform_3(%arg0: i32, %arg1: i32) -> (i32, i32) {
    %c0_i32 = arith.constant 0 : i32
    %c0_i32_0 = arith.constant 0 : i32
    %c0_i32_1 = arith.constant 0 : i32
    return %c0_i32, %c0_i32_0 : i32, i32
  }
  func.func @transform_4(%arg0: i32, %arg1: i32) -> (i32, i32) {
    %c0_i32 = arith.constant 0 : i32
    %c0_i32_0 = arith.constant 0 : i32
    %c0_i32_1 = arith.constant 0 : i32
    return %c0_i32, %c0_i32_0 : i32, i32
  }
  func.func @transform_5(%arg0: i32, %arg1: i32) -> (i32, i32) {
    %c0_i32 = arith.constant 0 : i32
    %c0_i32_0 = arith.constant 0 : i32
    %c0_i32_1 = arith.constant 0 : i32
    return %c0_i32, %c0_i32_0 : i32, i32
  }
  func.func @transform_6(%arg0: i32, %arg1: i32) -> (i32, i32) {
    %c0_i32 = arith.constant 0 : i32
    %c0_i32_0 = arith.constant 0 : i32
    %c0_i32_1 = arith.constant 0 : i32
    return %c0_i32, %c0_i32_0 : i32, i32
  }
  func.func @transform_7(%arg0: i32, %arg1: i32) -> (i32, i32, i32) {
    %c0_i32 = arith.constant 0 : i32
    %c0_i32_0 = arith.constant 0 : i32
    return %arg0, %arg1, %c0_i32 : i32, i32, i32
  }
  func.func @transform_8(%arg0: i32, %arg1: i32) -> (i32, i32, i32) {
    %c0_i32 = arith.constant 0 : i32
    %c0_i32_0 = arith.constant 0 : i32
    return %arg0, %arg1, %c0_i32 : i32, i32, i32
  }
  func.func @transform_9(%arg0: i32, %arg1: i32) -> (i32, i32, i32) {
    %c0_i32 = arith.constant 0 : i32
    %c0_i32_0 = arith.constant 0 : i32
    return %arg0, %arg1, %c0_i32 : i32, i32, i32
  }
}

</mosaic_0001>

<llo_original>
// kernel: tpu_custom_call.1
$region0: #{tpu_custom_call.1}
  #allocation0 [shape = 'u32[]', space=smem, size = 0x4, offset = 0x4, fixed_abs, tag = 'smem constant byte address 0x4 - core index']
  #allocation1 [shape = 'u32[72,128]{1,0:T(1,128)}', space=vmem, size = 0x9000, scoped, tag = 'internal scratch']
  %s0 = inlined_call_operand.vmem [shape: f32[2,8,32], index: 0, kind: input, shape index: {}]
  %s1 = inlined_call_operand.vmem [shape: f32[32,16], index: 1, kind: input, shape index: {}]
  %s2 = inlined_call_operand.vmem [shape: f32[1,16], index: 2, kind: input, shape index: {}]
  %s3 = inlined_call_operand.vmem [shape: f32[32,16], index: 3, kind: input, shape index: {}]
  %s4 = inlined_call_operand.vmem [shape: f32[1,16], index: 4, kind: input, shape index: {}]
  %s5 = inlined_call_operand.vmem [shape: f32[32,16], index: 5, kind: input, shape index: {}]
  %s6 = inlined_call_operand.vmem [shape: f32[1,16], index: 6, kind: input, shape index: {}]
  %s7 = inlined_call_operand.hbm [shape: f32[2,8,16], index: 7, kind: output, shape index: {0}]
  %s8 = inlined_call_operand.hbm [shape: f32[2,8,16], index: 8, kind: output, shape index: {1}]
  %s9 = inlined_call_operand.hbm [shape: f32[2,8,16], index: 9, kind: output, shape index: {2}]
  %10 = xla_tuple %s7, %s8, %s9
  %s11 = sld [smem:[#allocation0]]
  $region77: #{tpu_custom_call.1} parent=0
    _
  %s13 = ssub.s32 1, %s11
  %s14 = scalar_select 0, %s13, %s11
  $region1: #{tpu_custom_call.1} parent=0
    #allocation2 [shape = 'u8[8192]{0}', space=vmem, size = 0x2000, scoped, tag = 'output window, operand 0']
    #allocation3 [shape = 's32[2]{0}', space=sflag, size = 0x8, scoped, tag = 'scoped memory for tpu_custom_call.1']
    #allocation4 [shape = 'u8[8192]{0}', space=vmem, size = 0x2000, scoped, tag = 'output window, operand 1']
    #allocation5 [shape = 's32[2]{0}', space=sflag, size = 0x8, scoped, tag = 'scoped memory for tpu_custom_call.1']
    #allocation6 [shape = 'u8[8192]{0}', space=vmem, size = 0x2000, scoped, tag = 'output window, operand 2']
    %15 = vsyncpa [#allocation3], 0
    %s16 = scalar_lea.sflag [#allocation3], 1
    %17 = vsyncpa %s16, 0
    %18 = vsyncpa [#allocation5], 0
    %s19 = scalar_lea.sflag [#allocation5], 1
    %20 = vsyncpa %s19, 0
    loop: start=0, step=1, limit=4
    $region2: #{tpu_custom_call.1} parent=1 // loop_pre_header
      _
    $region3: #{tpu_custom_call.1} parent=1 // loop_header
      %s22 = sphi 0, %s26
      %p23 = scmp.ge.s32.totalorder %s22, 4
      %s29 = sphi 0, %s41
      %s30 = sphi 0, %s37
      %s31 = sphi 0, %s29
      %s32 = sphi 0, %s30
      %s33 = sphi 0, %s31
      %s34 = sphi 0, %s32
      %s46 = sphi 0, %s48
      %s49 = sphi 0, %s46
      %s50 = sphi 0, %s49
      %s66 = sphi 0, %s50
      %s70 = sphi 0, %s70
      %s72 = sphi 0, %s70
      %s73 = sphi 0, %s72
      %s87 = sphi 0, %s73
      %s91 = sphi 0, %s91
      %s93 = sphi 0, %s91
      %s94 = sphi 0, %s93
      %s108 = sphi 0, %s94
      %s112 = sphi 0, %s112
      %s114 = sphi 0, %s112
      %s115 = sphi 0, %s114
      %s129 = sphi 0, %s115
      %s133 = sphi 0, %s133
      %s135 = sphi 0, %s133
      %s136 = sphi 0, %s135
      %s150 = sphi 0, %s136
      %s154 = sphi 0, %s154
      %s156 = sphi 0, %s154
      %s157 = sphi 0, %s156
      %s171 = sphi 0, %s157
      %s175 = sphi 0, %s175
      %s177 = sphi 0, %s175
      %s178 = sphi 0, %s177
      %s192 = sphi 0, %s178
      %s200 = sphi 0, %s202
      %s203 = sphi 0, %s200
      %s204 = sphi 0, %s203
      %s220 = sphi 0, %s204
      %s228 = sphi 0, %s230
      %s231 = sphi 0, %s228
      %s232 = sphi 0, %s231
      %s248 = sphi 0, %s232
      %s256 = sphi 0, %s258
      %s259 = sphi 0, %s256
      %s260 = sphi 0, %s259
      %s276 = sphi 0, %s260
    $region4: #{tpu_custom_call.1} parent=1 // loop_header_branch
      %25 = sbr.rel (%p23) target = $region8
    $region5: #{tpu_custom_call.1} parent=1 // loop_body
      %s27 = ssub.s32 %s22, 1
      %s28 = ssub.s32 %s22, 2
      %s35 = sadd.s32 1, %s30
      %p36 = scmp.ge.s32.totalorder %s35, 1
      %s37 = scalar_select %p36, 0, %s35
      %s38 = sadd.s32 1, %s29
      %s39 = scalar_select %p36, %s38, %s29
      %p40 = scmp.ge.s32.totalorder %s39, 2
      %s41 = scalar_select %p40, 0, %s39
      %s42 = ssub.s32 %s29, %s41
      %s43 = ssub.s32 %s30, %s37
      %s44 = sor.u32 %s42, %s43
      %p45 = scmp.eq.s32.totalorder %s44, 0
      %s47 = sadd.s32 %s46, 1
      %s48 = scalar_select %p45, %s46, %s47
      %p51 = pneg %p45
      %p52 = scmp.eq.s32.totalorder %s22, 1
      %p53 = por %p51, %p52
      %p54 = scmp.ne.s32.totalorder %s46, %s49
      %p55 = scmp.eq.s32.totalorder %s22, 0
      %p56 = por %p54, %p55
      %p57 = scmp.ne.s32.totalorder %s46, %s49
      %p58 = scmp.eq.s32.totalorder %s27, 1
      %p59 = por %p57, %p58
      %p60 = scmp.ne.s32.totalorder %s49, %s50
      %p61 = scmp.eq.s32.totalorder %s27, 0
      %p62 = por %p60, %p61
      %p63 = scmp.ne.s32.totalorder %s49, %s50
      %p64 = scmp.eq.s32.totalorder %s28, 1
      %p65 = por %p63, %p64
      %p67 = scmp.ne.s32.totalorder %s50, %s66
      %p68 = scmp.eq.s32.totalorder %s28, 0
      %p69 = por %p67, %p68
      %s71 = sadd.s32 %s70, 1
      %p74 = scmp.eq.s32.totalorder %s22, 1
      %p75 = scmp.ne.s32.totalorder %s70, %s72
      %p76 = scmp.eq.s32.totalorder %s22, 0
      %p77 = por %p75, %p76
      %p78 = scmp.ne.s32.totalorder %s70, %s72
      %p79 = scmp.eq.s32.totalorder %s27, 1
      %p80 = por %p78, %p79
      %p81 = scmp.ne.s32.totalorder %s72, %s73
      %p82 = scmp.eq.s32.totalorder %s27, 0
      %p83 = por %p81, %p82
      %p84 = scmp.ne.s32.totalorder %s72, %s73
      %p85 = scmp.eq.s32.totalorder %s28, 1
      %p86 = por %p84, %p85
      %p88 = scmp.ne.s32.totalorder %s73, %s87
      %p89 = scmp.eq.s32.totalorder %s28, 0
      %p90 = por %p88, %p89
      %s92 = sadd.s32 %s91, 1
      %p95 = scmp.eq.s32.totalorder %s22, 1
      %p96 = scmp.ne.s32.totalorder %s91, %s93
      %p97 = scmp.eq.s32.totalorder %s22, 0
      %p98 = por %p96, %p97
      %p99 = scmp.ne.s32.totalorder %s91, %s93
      %p100 = scmp.eq.s32.totalorder %s27, 1
      %p101 = por %p99, %p100
      %p102 = scmp.ne.s32.totalorder %s93, %s94
      %p103 = scmp.eq.s32.totalorder %s27, 0
      %p104 = por %p102, %p103
      %p105 = scmp.ne.s32.totalorder %s93, %s94
      %p106 = scmp.eq.s32.totalorder %s28, 1
      %p107 = por %p105, %p106
      %p109 = scmp.ne.s32.totalorder %s94, %s108
      %p110 = scmp.eq.s32.totalorder %s28, 0
      %p111 = por %p109, %p110
      %s113 = sadd.s32 %s112, 1
      %p116 = scmp.eq.s32.totalorder %s22, 1
      %p117 = scmp.ne.s32.totalorder %s112, %s114
      %p118 = scmp.eq.s32.totalorder %s22, 0
      %p119 = por %p117, %p118
      %p120 = scmp.ne.s32.totalorder %s112, %s114
      %p121 = scmp.eq.s32.totalorder %s27, 1
      %p122 = por %p120, %p121
      %p123 = scmp.ne.s32.totalorder %s114, %s115
      %p124 = scmp.eq.s32.totalorder %s27, 0
      %p125 = por %p123, %p124
      %p126 = scmp.ne.s32.totalorder %s114, %s115
      %p127 = scmp.eq.s32.totalorder %s28, 1
      %p128 = por %p126, %p127
      %p130 = scmp.ne.s32.totalorder %s115, %s129
      %p131 = scmp.eq.s32.totalorder %s28, 0
      %p132 = por %p130, %p131
      %s134 = sadd.s32 %s133, 1
      %p137 = scmp.eq.s32.totalorder %s22, 1
      %p138 = scmp.ne.s32.totalorder %s133, %s135
      %p139 = scmp.eq.s32.totalorder %s22, 0
      %p140 = por %p138, %p139
      %p141 = scmp.ne.s32.totalorder %s133, %s135
      %p142 = scmp.eq.s32.totalorder %s27, 1
      %p143 = por %p141, %p142
      %p144 = scmp.ne.s32.totalorder %s135, %s136
      %p145 = scmp.eq.s32.totalorder %s27, 0
      %p146 = por %p144, %p145
      %p147 = scmp.ne.s32.totalorder %s135, %s136
      %p148 = scmp.eq.s32.totalorder %s28, 1
      %p149 = por %p147, %p148
      %p151 = scmp.ne.s32.totalorder %s136, %s150
      %p152 = scmp.eq.s32.totalorder %s28, 0
      %p153 = por %p151, %p152
      %s155 = sadd.s32 %s154, 1
      %p158 = scmp.eq.s32.totalorder %s22, 1
      %p159 = scmp.ne.s32.totalorder %s154, %s156
      %p160 = scmp.eq.s32.totalorder %s22, 0
      %p161 = por %p159, %p160
      %p162 = scmp.ne.s32.totalorder %s154, %s156
      %p163 = scmp.eq.s32.totalorder %s27, 1
      %p164 = por %p162, %p163
      %p165 = scmp.ne.s32.totalorder %s156, %s157
      %p166 = scmp.eq.s32.totalorder %s27, 0
      %p167 = por %p165, %p166
      %p168 = scmp.ne.s32.totalorder %s156, %s157
      %p169 = scmp.eq.s32.totalorder %s28, 1
      %p170 = por %p168, %p169
      %p172 = scmp.ne.s32.totalorder %s157, %s171
      %p173 = scmp.eq.s32.totalorder %s28, 0
      %p174 = por %p172, %p173
      %s176 = sadd.s32 %s175, 1
      %p179 = scmp.eq.s32.totalorder %s22, 1
      %p180 = scmp.ne.s32.totalorder %s175, %s177
      %p181 = scmp.eq.s32.totalorder %s22, 0
      %p182 = por %p180, %p181
      %p183 = scmp.ne.s32.totalorder %s175, %s177
      %p184 = scmp.eq.s32.totalorder %s27, 1
      %p185 = por %p183, %p184
      %p186 = scmp.ne.s32.totalorder %s177, %s178
      %p187 = scmp.eq.s32.totalorder %s27, 0
      %p188 = por %p186, %p187
      %p189 = scmp.ne.s32.totalorder %s177, %s178
      %p190 = scmp.eq.s32.totalorder %s28, 1
      %p191 = por %p189, %p190
      %p193 = scmp.ne.s32.totalorder %s178, %s192
      %p194 = scmp.eq.s32.totalorder %s28, 0
      %p195 = por %p193, %p194
      %s196 = ssub.s32 %s29, %s41
      %s197 = ssub.s32 %s30, %s37
      %s198 = sor.u32 %s196, %s197
      %p199 = scmp.eq.s32.totalorder %s198, 0
      %s201 = sadd.s32 %s200, 1
      %s202 = scalar_select %p199, %s200, %s201
      %p205 = pneg %p199
      %p206 = scmp.eq.s32.totalorder %s22, 1
      %p207 = por %p205, %p206
      %p208 = scmp.ne.s32.totalorder %s200, %s203
      %p209 = scmp.eq.s32.totalorder %s22, 0
      %p210 = por %p208, %p209
      %p211 = scmp.ne.s32.totalorder %s200, %s203
      %p212 = scmp.eq.s32.totalorder %s27, 1
      %p213 = por %p211, %p212
      %p214 = scmp.ne.s32.totalorder %s203, %s204
      %p215 = scmp.eq.s32.totalorder %s27, 0
      %p216 = por %p214, %p215
      %p217 = scmp.ne.s32.totalorder %s203, %s204
      %p218 = scmp.eq.s32.totalorder %s28, 1
      %p219 = por %p217, %p218
      %p221 = scmp.ne.s32.totalorder %s204, %s220
      %p222 = scmp.eq.s32.totalorder %s28, 0
      %p223 = por %p221, %p222
      %s224 = ssub.s32 %s29, %s41
      %s225 = ssub.s32 %s30, %s37
      %s226 = sor.u32 %s224, %s225
      %p227 = scmp.eq.s32.totalorder %s226, 0
      %s229 = sadd.s32 %s228, 1
      %s230 = scalar_select %p227, %s228, %s229
      %p233 = pneg %p227
      %p234 = scmp.eq.s32.totalorder %s22, 1
      %p235 = por %p233, %p234
      %p236 = scmp.ne.s32.totalorder %s228, %s231
      %p237 = scmp.eq.s32.totalorder %s22, 0
      %p238 = por %p236, %p237
      %p239 = scmp.ne.s32.totalorder %s228, %s231
      %p240 = scmp.eq.s32.totalorder %s27, 1
      %p241 = por %p239, %p240
      %p242 = scmp.ne.s32.totalorder %s231, %s232
      %p243 = scmp.eq.s32.totalorder %s27, 0
      %p244 = por %p242, %p243
      %p245 = scmp.ne.s32.totalorder %s231, %s232
      %p246 = scmp.eq.s32.totalorder %s28, 1
      %p247 = por %p245, %p246
      %p249 = scmp.ne.s32.totalorder %s232, %s248
      %p250 = scmp.eq.s32.totalorder %s28, 0
      %p251 = por %p249, %p250
      %s252 = ssub.s32 %s29, %s41
      %s253 = ssub.s32 %s30, %s37
      %s254 = sor.u32 %s252, %s253
      %p255 = scmp.eq.s32.totalorder %s254, 0
      %s257 = sadd.s32 %s256, 1
      %s258 = scalar_select %p255, %s256, %s257
      %p261 = pneg %p255
      %p262 = scmp.eq.s32.totalorder %s22, 1
      %p263 = por %p261, %p262
      %p264 = scmp.ne.s32.totalorder %s256, %s259
      %p265 = scmp.eq.s32.totalorder %s22, 0
      %p266 = por %p264, %p265
      %p267 = scmp.ne.s32.totalorder %s256, %s259
      %p268 = scmp.eq.s32.totalorder %s27, 1
      %p269 = por %p267, %p268
      %p270 = scmp.ne.s32.totalorder %s259, %s260
      %p271 = scmp.eq.s32.totalorder %s27, 0
      %p272 = por %p270, %p271
      %p273 = scmp.ne.s32.totalorder %s259, %s260
      %p274 = scmp.eq.s32.totalorder %s28, 1
      %p275 = por %p273, %p274
      %p277 = scmp.ne.s32.totalorder %s260, %s276
      %p278 = scmp.eq.s32.totalorder %s28, 0
      %p279 = por %p277, %p278
      %p280 = scmp.le.s32.totalorder 1, %s22
      %p281 = scmp.lt.s32.totalorder %s22, 3
      %p282 = pnand %p280, %p281
      %p283 = pneg %p282
      // Predicated region
      $region9: #{tpu_custom_call.1} parent=5 // pred_check
        _
      $region10: #{tpu_custom_call.1} parent=5 // pred_check_branch
        %285 = sbr.rel (%p282) target = $region12
      $region11: #{tpu_custom_call.1} parent=5 // pred_region
        %s286 = ssub.s32 %s22, 1
        // Predicated region
        $region13: #{tpu_custom_call.1} parent=11 // pred_check
          %p287 = pneg %p83
        $region14: #{tpu_custom_call.1} parent=11 // pred_check_branch
          %289 = sbr.rel (%p287) target = $region16
        $region15: #{tpu_custom_call.1} parent=11 // pred_region
          _
        $region16: #{tpu_custom_call.1} parent=11 // pred_fallthru
          _
        // Predicated region
        $region17: #{tpu_custom_call.1} parent=11 // pred_check
          %p290 = pneg %p104
        $region18: #{tpu_custom_call.1} parent=11 // pred_check_branch
          %292 = sbr.rel (%p290) target = $region20
        $region19: #{tpu_custom_call.1} parent=11 // pred_region
          _
        $region20: #{tpu_custom_call.1} parent=11 // pred_fallthru
          _
        // Predicated region
        $region21: #{tpu_custom_call.1} parent=11 // pred_check
          %p293 = pneg %p125
        $region22: #{tpu_custom_call.1} parent=11 // pred_check_branch
          %295 = sbr.rel (%p293) target = $region24
        $region23: #{tpu_custom_call.1} parent=11 // pred_region
          _
        $region24: #{tpu_custom_call.1} parent=11 // pred_fallthru
          _
        // Predicated region
        $region25: #{tpu_custom_call.1} parent=11 // pred_check
          %p296 = pneg %p146
        $region26: #{tpu_custom_call.1} parent=11 // pred_check_branch
          %298 = sbr.rel (%p296) target = $region28
        $region27: #{tpu_custom_call.1} parent=11 // pred_region
          _
        $region28: #{tpu_custom_call.1} parent=11 // pred_fallthru
          _
        // Predicated region
        $region29: #{tpu_custom_call.1} parent=11 // pred_check
          %p299 = pneg %p167
        $region30: #{tpu_custom_call.1} parent=11 // pred_check_branch
          %301 = sbr.rel (%p299) target = $region32
        $region31: #{tpu_custom_call.1} parent=11 // pred_region
          _
        $region32: #{tpu_custom_call.1} parent=11 // pred_fallthru
          _
        // Predicated region
        $region33: #{tpu_custom_call.1} parent=11 // pred_check
          %p302 = pneg %p188
        $region34: #{tpu_custom_call.1} parent=11 // pred_check_branch
          %304 = sbr.rel (%p302) target = $region36
        $region35: #{tpu_custom_call.1} parent=11 // pred_region
          _
        $region36: #{tpu_custom_call.1} parent=11 // pred_fallthru
          _
      $region12: #{tpu_custom_call.1} parent=5 // pred_fallthru
        _
      %p305 = scmp.lt.s32.totalorder %s22, 2
      // Predicated region
      $region37: #{tpu_custom_call.1} parent=5 // pred_check
        %p306 = pneg %p305
      $region38: #{tpu_custom_call.1} parent=5 // pred_check_branch
        %308 = sbr.rel (%p306) target = $region40
      $region39: #{tpu_custom_call.1} parent=5 // pred_region
        // Predicated region
        $region41: #{tpu_custom_call.1} parent=39 // pred_check
          %p309 = pneg %p56
        $region42: #{tpu_custom_call.1} parent=39 // pred_check_branch
          %311 = sbr.rel (%p309) target = $region44
        $region43: #{tpu_custom_call.1} parent=39 // pred_region
          %p312 = scmp.lt.s32.totalorder %s29, 1
          %s313 = scalar_select %p312, %s29, 1
          %p314 = scmp.lt.s32.totalorder %s30, 0
          %s315 = scalar_select %p314, %s30, 0
          %s316 = sadd.s32 %s315, %s313
          %s317 = smul.addr %s316, 8
          %s318 = scalar_lea.vmem %s0, %s317
        $region44: #{tpu_custom_call.1} parent=39 // pred_fallthru
          _
      $region40: #{tpu_custom_call.1} parent=5 // pred_fallthru
        _
      %p319 = scmp.le.s32.totalorder 1, %s22
      %p320 = scmp.lt.s32.totalorder %s22, 3
      %p321 = pnand %p319, %p320
      %p322 = pneg %p321
      // Predicated region
      $region45: #{tpu_custom_call.1} parent=5 // pred_check
        _
      $region46: #{tpu_custom_call.1} parent=5 // pred_check_branch
        %324 = sbr.rel (%p321) target = $region48
      $region47: #{tpu_custom_call.1} parent=5 // pred_region
        %s325 = ssub.s32 %s22, 1
        %p326 = scmp.lt.s32.totalorder %s31, 1
        %s327 = scalar_select %p326, %s31, 1
        %p328 = scmp.lt.s32.totalorder %s32, 0
        %s329 = scalar_select %p328, %s32, 0
        %s330 = sadd.s32 %s329, %s327
        %s331 = smul.addr %s330, 8
        %s332 = scalar_lea.vmem %s0, %s331
        %p333 = pneg %p62
        %p334 = pneg %p59
        %p335 = pneg %p83
        %p336 = pneg %p80
        %p337 = pneg %p104
        %p338 = pneg %p101
        %p339 = pneg %p125
        %p340 = pneg %p122
        %p341 = pneg %p146
        %p342 = pneg %p143
        %p343 = pneg %p167
        %p344 = pneg %p164
        %p345 = pneg %p188
        %p346 = pneg %p185
        %p347 = pneg %p216
        %p348 = pneg %p213
        %s349 = sand.u32 %s203, 1
        %s350 = scalar_lea.sflag [#allocation3], %s349
        %s351 = sand.u32 %s203, 1
        %s352 = smul.addr %s351, 8
        %s353 = scalar_lea.vmem [#allocation2], %s352
        %p354 = pneg %p244
        %p355 = pneg %p241
        %s356 = sand.u32 %s27, 1
        %s357 = scalar_lea.sflag [#allocation5], %s356
        %s358 = sand.u32 %s231, 1
        %s359 = smul.addr %s358, 8
        %s360 = scalar_lea.vmem [#allocation4], %s359
        %p361 = pneg %p272
        %p362 = pneg %p269
        %s363 = sand.u32 %s27, 1
        %s364 = scalar_lea.sflag [#allocation5], %s363
        %s365 = sand.u32 %s259, 1
        %s366 = smul.addr %s365, 8
        %s367 = scalar_lea.vmem [#allocation6], %s366
        %p368 = scmp.lt.s32.totalorder %s31, 1
        %s369 = scalar_select %p368, %s31, 1
        %p370 = scmp.lt.s32.totalorder %s32, 0
        %s371 = scalar_select %p370, %s32, 0
        %s372 = sadd.s32 %s371, %s369
        %s373 = smul.addr %s372, 8
        %s374 = scalar_lea.vmem %s0, %s373
        %v375 = vld [vmem:[%s374] sm:$0xff]
        %v376 = vld [vmem:[%s1] sm:$0xff]
        %v377 = vld [vmem:[%s1 + $0x8] sm:$0xff]
        %v378 = vld [vmem:[%s1 + $0x10] sm:$0xff]
        %v379 = vld [vmem:[%s1 + $0x18] sm:$0xff]
        %v380 = vld [vmem:[%s2] sm:$0x1]
        %v382 = vperm.slane %v380, 0
        %vm384 = vcmask 261120
        %v386 = vsel %vm384, %v375, 0
        %388 = vmatpush.msra.mxu0 0.0
        %389 = vmatpush.msra.mxu0 0.0
        %390 = vmatpush.msra.mxu0 0.0
        %391 = vmatpush.msra.mxu0 0.0
        %392 = vmatpush.msra.mxu0 0.0
        %393 = vmatpush.msra.mxu0 0.0
        %394 = vmatpush.msra.mxu0 0.0
        %395 = vmatpush.msra.mxu0 0.0
        %396 = vmatpush.msra.mxu0 0.0
        %397 = vmatpush.msra.mxu0 0.0
        %398 = vmatpush.msra.mxu0 0.0
        %399 = vmatpush.msra.mxu0 0.0
        %400 = vmatpush.msra.mxu0 %v379
        %401 = vmatpush.msra.mxu0 %v378
        %402 = vmatpush.msra.mxu0 %v377
        %403 = vmatpush.msra.mxu0 %v376
        %404 = vmatmul.f32.gmra.mxu0 %v386
        %v405 = vpop.f32.mrf.mxu0
        %v406 = vadd.f32 %v382, %v405
        %407 = vdwg.mxu0
        %v408 = vmul.f32 %v406, 0.25
        %vm409 = vcmask 130048
        %410 = vst.msk [vmem:[%s353] sm:$0xff] %vm409, %v408
        %v411 = vld [vmem:[%s3] sm:$0xff]
        %v412 = vld [vmem:[%s3 + $0x8] sm:$0xff]
        %v413 = vld [vmem:[%s3 + $0x10] sm:$0xff]
        %v414 = vld [vmem:[%s3 + $0x18] sm:$0xff]
        %v415 = vld [vmem:[%s4] sm:$0x1]
        %v417 = vperm.slane %v415, 0
        %419 = vmatpush.msra.mxu0 0.0
        %420 = vmatpush.msra.mxu0 0.0
        %421 = vmatpush.msra.mxu0 0.0
        %422 = vmatpush.msra.mxu0 0.0
        %423 = vmatpush.msra.mxu0 0.0
        %424 = vmatpush.msra.mxu0 0.0
        %425 = vmatpush.msra.mxu0 0.0
        %426 = vmatpush.msra.mxu0 0.0
        %427 = vmatpush.msra.mxu0 0.0
        %428 = vmatpush.msra.mxu0 0.0
        %429 = vmatpush.msra.mxu0 0.0
        %430 = vmatpush.msra.mxu0 0.0
        %431 = vmatpush.msra.mxu0 %v414
        %432 = vmatpush.msra.mxu0 %v413
        %433 = vmatpush.msra.mxu0 %v412
        %434 = vmatpush.msra.mxu0 %v411
        %435 = vmatmul.f32.gmra.mxu0 %v386
        %v436 = vpop.f32.mrf.mxu0
        %v437 = vadd.f32 %v417, %v436
        %438 = vdwg.mxu0
        %439 = vst.msk [vmem:[%s360] sm:$0xff] %vm409, %v437
        %v440 = vld [vmem:[%s5] sm:$0xff]
        %v441 = vld [vmem:[%s5 + $0x8] sm:$0xff]
        %v442 = vld [vmem:[%s5 + $0x10] sm:$0xff]
        %v443 = vld [vmem:[%s5 + $0x18] sm:$0xff]
        %v444 = vld [vmem:[%s6] sm:$0x1]
        %v446 = vperm.slane %v444, 0
        %448 = vmatpush.msra.mxu0 0.0
        %449 = vmatpush.msra.mxu0 0.0
        %450 = vmatpush.msra.mxu0 0.0
        %451 = vmatpush.msra.mxu0 0.0
        %452 = vmatpush.msra.mxu0 0.0
        %453 = vmatpush.msra.mxu0 0.0
        %454 = vmatpush.msra.mxu0 0.0
        %455 = vmatpush.msra.mxu0 0.0
        %456 = vmatpush.msra.mxu0 0.0
        %457 = vmatpush.msra.mxu0 0.0
        %458 = vmatpush.msra.mxu0 0.0
        %459 = vmatpush.msra.mxu0 0.0
        %460 = vmatpush.msra.mxu0 %v443
        %461 = vmatpush.msra.mxu0 %v442
        %462 = vmatpush.msra.mxu0 %v441
        %463 = vmatpush.msra.mxu0 %v440
        %464 = vmatmul.f32.gmra.mxu0 %v386
        %v465 = vpop.f32.mrf.mxu0
        %v466 = vadd.f32 %v446, %v465
        %467 = vdwg.mxu0
        %468 = vst.msk [vmem:[%s367] sm:$0xff] %vm409, %v466
        %s469 = sand.u32 %s203, 1
        %s470 = scalar_lea.sflag [#allocation3], %s469
        %s471 = sand.u32 %s203, 1
        %s472 = smul.addr %s471, 8
        %s473 = scalar_lea.vmem [#allocation2], %s472
        %s474 = sand.u32 %s27, 1
        %s475 = scalar_lea.sflag [#allocation5], %s474
        %s476 = sand.u32 %s231, 1
        %s477 = smul.addr %s476, 8
        %s478 = scalar_lea.vmem [#allocation4], %s477
        %s479 = sand.u32 %s27, 1
        %s480 = scalar_lea.sflag [#allocation5], %s479
        %s481 = sand.u32 %s259, 1
        %s482 = smul.addr %s481, 8
        %s483 = scalar_lea.vmem [#allocation6], %s482
        // Predicated region
        $region49: #{tpu_custom_call.1} parent=47 // pred_check
          %p484 = pneg %p213
        $region50: #{tpu_custom_call.1} parent=47 // pred_check_branch
          %486 = sbr.rel (%p484) target = $region52
        $region51: #{tpu_custom_call.1} parent=47 // pred_region
          %488 = vsyncadd %s470, 0
          %s489 = sadd.s32 %s32, %s31
          %s490 = smul.addr %s489, 8
          %s491 = scalar_lea.hbm %s7, %s490
          %s493 = sshll.u32 %s473, 4
          %s494 = int_to_ptr.vmem [resolvable:$true] %s493
          %s495 = sshll.u32 %s491, 4
          %s496 = int_to_ptr.hbm [resolvable:$true] %s495
          %498 = dma.vmem_to_hbm [thread:$0]  %s494, 128, %s496, %s470
        $region52: #{tpu_custom_call.1} parent=47 // pred_fallthru
          _
        // Predicated region
        $region53: #{tpu_custom_call.1} parent=47 // pred_check
          %p499 = pneg %p241
        $region54: #{tpu_custom_call.1} parent=47 // pred_check_branch
          %501 = sbr.rel (%p499) target = $region56
        $region55: #{tpu_custom_call.1} parent=47 // pred_region
          %503 = vsyncadd %s475, 0
          %s504 = sadd.s32 %s32, %s31
          %s505 = smul.addr %s504, 8
          %s506 = scalar_lea.hbm %s8, %s505
          %s508 = sshll.u32 %s478, 4
          %s509 = int_to_ptr.vmem [resolvable:$true] %s508
          %s510 = sshll.u32 %s506, 4
          %s511 = int_to_ptr.hbm [resolvable:$true] %s510
          %513 = dma.vmem_to_hbm [thread:$0]  %s509, 128, %s511, %s475
        $region56: #{tpu_custom_call.1} parent=47 // pred_fallthru
          _
        // Predicated region
        $region57: #{tpu_custom_call.1} parent=47 // pred_check
          %p514 = pneg %p269
        $region58: #{tpu_custom_call.1} parent=47 // pred_check_branch
          %516 = sbr.rel (%p514) target = $region60
        $region59: #{tpu_custom_call.1} parent=47 // pred_region
          %518 = vsyncadd %s480, 0
          %s519 = sadd.s32 %s32, %s31
          %s520 = smul.addr %s519, 8
          %s521 = scalar_lea.hbm %s9, %s520
          %s523 = sshll.u32 %s483, 4
          %s524 = int_to_ptr.vmem [resolvable:$true] %s523
          %s525 = sshll.u32 %s521, 4
          %s526 = int_to_ptr.hbm [resolvable:$true] %s525
          %528 = dma.vmem_to_hbm [thread:$0]  %s524, 128, %s526, %s480
        $region60: #{tpu_custom_call.1} parent=47 // pred_fallthru
          _
      $region48: #{tpu_custom_call.1} parent=5 // pred_fallthru
        _
      %p529 = scmp.le.s32.totalorder 2, %s22
      // Predicated region
      $region61: #{tpu_custom_call.1} parent=5 // pred_check
        %p530 = pneg %p529
      $region62: #{tpu_custom_call.1} parent=5 // pred_check_branch
        %532 = sbr.rel (%p530) target = $region64
      $region63: #{tpu_custom_call.1} parent=5 // pred_region
        %s533 = ssub.s32 %s22, 2
        // Predicated region
        $region65: #{tpu_custom_call.1} parent=63 // pred_check
          %p534 = pneg %p219
        $region66: #{tpu_custom_call.1} parent=63 // pred_check_branch
          %536 = sbr.rel (%p534) target = $region68
        $region67: #{tpu_custom_call.1} parent=63 // pred_region
          %s537 = sand.u32 %s204, 1
          %s538 = scalar_lea.sflag [#allocation3], %s537
          %s539 = sand.u32 %s204, 1
          %s540 = smul.addr %s539, 8
          %s541 = scalar_lea.vmem [#allocation2], %s540
          %543 = dma.done %s538, 128
        $region68: #{tpu_custom_call.1} parent=63 // pred_fallthru
          _
        // Predicated region
        $region69: #{tpu_custom_call.1} parent=63 // pred_check
          %p544 = pneg %p247
        $region70: #{tpu_custom_call.1} parent=63 // pred_check_branch
          %546 = sbr.rel (%p544) target = $region72
        $region71: #{tpu_custom_call.1} parent=63 // pred_region
          %s547 = sand.u32 %s28, 1
          %s548 = scalar_lea.sflag [#allocation5], %s547
          %s549 = sand.u32 %s232, 1
          %s550 = smul.addr %s549, 8
          %s551 = scalar_lea.vmem [#allocation4], %s550
          %553 = dma.done %s548, 128
        $region72: #{tpu_custom_call.1} parent=63 // pred_fallthru
          _
        // Predicated region
        $region73: #{tpu_custom_call.1} parent=63 // pred_check
          %p554 = pneg %p275
        $region74: #{tpu_custom_call.1} parent=63 // pred_check_branch
          %556 = sbr.rel (%p554) target = $region76
        $region75: #{tpu_custom_call.1} parent=63 // pred_region
          %s557 = sand.u32 %s28, 1
          %s558 = scalar_lea.sflag [#allocation5], %s557
          %s559 = sand.u32 %s260, 1
          %s560 = smul.addr %s559, 8
          %s561 = scalar_lea.vmem [#allocation6], %s560
          %563 = dma.done %s558, 128
        $region76: #{tpu_custom_call.1} parent=63 // pred_fallthru
          _
      $region64: #{tpu_custom_call.1} parent=5 // pred_fallthru
        _
    $region6: #{tpu_custom_call.1} parent=1 // loop_footer
      %s26 = sadd.s32 1, %s22
    $region7: #{tpu_custom_call.1} parent=1 // loop_footer_branch
      %21 = sbr.rel target = $region3
    $region8: #{tpu_custom_call.1} parent=1 // loop_exit
      _
    %564 = vsyncpa [#allocation3], 1
    %s565 = scalar_lea.sflag [#allocation3], 1
    %566 = vsyncpa %s565, 1
    %567 = vsyncpa [#allocation5], 1
    %s568 = scalar_lea.sflag [#allocation5], 1
    %569 = vsyncpa %s568, 1

</llo_original>
